<compile_context>
chip_gen: v7x
topology: tpu7x:2x2x1
jax: 0.10.0
libtpu: 0.0.40
codegen_flags: <defaults>
</compile_context>

<pallas_src>
import numpy as np
import jax
import jax.numpy as jnp
from jax.experimental import pallas as pl
from jax.experimental.pallas import tpu as pltpu


def _cdiv(a, b):
    return -(-a // b)


# ---------------------------------------------------------------------------
# Per-generation tuning: (channel-tile byte target, kernel-2 vmem limit).
# Steady state for kernel 2 is ~4x the tile (double-buffered in + out) plus a
# small resident mask row, so the limits below leave comfortable headroom.
# ---------------------------------------------------------------------------
def _hw_budgets():
    kind = ""
    try:
        kind = jax.devices()[0].device_kind.lower()
    except Exception:
        pass
    if "v5" in kind:            # 0.82 TB/s HBM: per-step overhead already small
        return 4 << 20, 64 << 20
    if "v6" in kind:            # 128 MiB physical VMEM: let tiles grow
        return 12 << 20, 96 << 20
    if "7" in kind:             # v7x: 64 MiB physical VMEM is the binding limit
        return 10 << 20, 48 << 20
    return 8 << 20, 48 << 20    # unknown chip: safe on every generation


# ---------------------------------------------------------------------------
# Kernel 1: per-batch DropBlock keep-mask (1 = keep), computed once.
# A position is KEPT iff the block_size x block_size window-min of the noise
# is >= gamma (equivalent to 1 - maxpool(noise < gamma)).  Min-pool is
# separable: W (lane) pass then H (sublane) pass.
# ---------------------------------------------------------------------------
def _make_mask_kernel(gamma, block_size, H, W):
    pad = block_size // 2          # matches torch F.max_pool2d padding
    Wp = W + 2 * pad               # room for offsets 0..block_size-1
    Hp = H + 2 * pad
    BIG = 2.0                      # any value >= gamma (noise is in [0, 1))

    def kernel(noise_ref, keep_ref, padw_ref, padh_ref):
        noise = noise_ref[...]                                   # (1, H, W)

        # ---- horizontal pass (lane axis) ----
        padw_ref[...] = jnp.full((1, H, Wp), BIG, jnp.float32)
        padw_ref[:, :, pl.ds(pad, W)] = noise
        padded_w = padw_ref[...]
        pooled_w = padded_w[:, :, 0:W]
        for d in range(1, block_size):
            pooled_w = jnp.minimum(pooled_w, padded_w[:, :, d:d + W])

        # ---- vertical pass (sublane axis) ----
        padh_ref[...] = jnp.full((1, Hp, W), BIG, jnp.float32)
        padh_ref[:, pl.ds(pad, H), :] = pooled_w
        padded_h = padh_ref[...]
        pooled = padded_h[:, 0:H, :]
        for d in range(1, block_size):
            pooled = jnp.minimum(pooled, padded_h[:, d:d + H, :])

        keep_ref[...] = (pooled >= jnp.float32(gamma)).astype(jnp.float32)

    return kernel, Hp, Wp


# ---------------------------------------------------------------------------
# Kernel 2: hot loop — lane-dense broadcast multiply over a (B, C-tile) grid.
#   scale_ref: (1, 1) f32 in SMEM, smask_ref: (1, 1, HW) f32 (per-batch row),
#   x_ref / out_ref: (1, tc, HW) in x.dtype (never upcast).
# ---------------------------------------------------------------------------
def _scaled_mul_kernel(scale_ref, smask_ref, x_ref, out_ref):
    m = (smask_ref[...] * scale_ref[0, 0]).astype(x_ref.dtype)   # (1, 1, HW)
    out_ref[...] = x_ref[...] * m


def _choose_channel_tile(B, C, HW, itemsize, target_bytes):
    """Channel tile for a (1, tc, HW) block: tc is a multiple of 8 (or == C),
    sized so tc*HW*itemsize ~<= target_bytes, with balanced ragged tiles."""
    bytes_per_c = max(1, HW * itemsize)
    tc = C
    if C * bytes_per_c > target_bytes:
        tc = max(1, target_bytes // bytes_per_c)
        ntiles = _cdiv(C, tc)
        tc = _cdiv(C, ntiles)               # balance tile sizes across the grid
        tc = min(C, _cdiv(tc, 8) * 8)       # sublane-align (multiple of 8)
        if tc < 8:
            tc = min(8, C)                  # never sub-8 unless C itself is
    elif B == 1 and C >= 16:
        # give megacore / pipelining at least 2 grid steps for tiny tensors
        tc = min(C, _cdiv(_cdiv(C, 2), 8) * 8)
    return tc


def dropblock2d_pallas(x, noise, drop_prob, block_size):
    """x: (B, C, H, W); noise: (B, H, W) uniform[0,1) f32."""
    B, C, H, W = x.shape
    HW = H * W
    gamma = float(drop_prob) / float(block_size ** 2)
    tile_target, vmem_limit = _hw_budgets()

    # ---- kernel 1: per-batch keep mask (0/1), pipelined over B ----
    mask_kernel, Hp, Wp = _make_mask_kernel(gamma, block_size, H, W)
    keep = pl.pallas_call(
        mask_kernel,
        out_shape=jax.ShapeDtypeStruct((B, H, W), jnp.float32),
        grid=(B,),
        in_specs=[pl.BlockSpec((1, H, W), lambda b: (b, 0, 0))],
        out_specs=pl.BlockSpec((1, H, W), lambda b: (b, 0, 0)),
        scratch_shapes=[pltpu.VMEM((1, H, Wp), jnp.float32),
                        pltpu.VMEM((1, Hp, W), jnp.float32)],
        compiler_params=pltpu.CompilerParams(
            dimension_semantics=("parallel",)),
    )(noise.astype(jnp.float32))

    # Global normalization scale (tiny reduce outside the kernels; clamp keeps
    # the all-dropped corner case finite, matched by the local reference).
    numel = jnp.float32(B * H * W)
    kept = jnp.sum(keep)
    scale = (numel / jnp.maximum(kept, jnp.float32(1.0)))
    scale = jnp.reshape(scale, (1, 1)).astype(jnp.float32)

    # ---- kernel 2: lane-dense streamed multiply ----
    x3 = x.reshape(B, C, HW)
    keep3 = keep.reshape(B, 1, HW)

    tc = _choose_channel_tile(B, C, HW, x.dtype.itemsize, tile_target)
    n_ct = _cdiv(C, tc)

    out3 = pl.pallas_call(
        _scaled_mul_kernel,
        out_shape=jax.ShapeDtypeStruct((B, C, HW), x.dtype),
        grid=(B, n_ct),
        in_specs=[
            pl.BlockSpec(memory_space=pltpu.MemorySpace.SMEM),      # scale (1,1)
            pl.BlockSpec((1, 1, HW), lambda b, i: (b, 0, 0)),       # mask row
            pl.BlockSpec((1, tc, HW), lambda b, i: (b, i, 0)),      # x tile
        ],
        out_specs=pl.BlockSpec((1, tc, HW), lambda b, i: (b, i, 0)),
        compiler_params=pltpu.CompilerParams(
            dimension_semantics=("parallel", "parallel"),
            vmem_limit_bytes=int(vmem_limit),
        ),
    )(scale, keep3, x3)

    return out3.reshape(B, C, H, W)


# ---------------------------------------------------------------------------
# Module-level wrappers (host-side state, mirrors the torch modules)
# ---------------------------------------------------------------------------
class DropBlock2D:
    """JAX/Pallas equivalent of `dropblock.DropBlock2D` (training mode)."""

    def __init__(self, drop_prob, block_size):
        self.drop_prob = float(drop_prob)
        self.block_size = int(block_size)

    def __call__(self, x, key):
        if self.drop_prob == 0.0:
            return x  # identity, same as the torch module
        B, C, H, W = x.shape
        noise = jax.random.uniform(key, (B, H, W), dtype=jnp.float32)
        return dropblock2d_pallas(x, noise, self.drop_prob, self.block_size)


class LinearScheduler:
    """Faithful port of the PyTorch LinearScheduler: forward == dropblock(x)."""

    def __init__(self, dropblock, start_value, stop_value, nr_steps):
        self.dropblock = dropblock
        self.i = 0
        self.drop_values = np.linspace(start=start_value, stop=stop_value,
                                       num=int(nr_steps))

    def __call__(self, x, key):
        return self.dropblock(x, key)

    def step(self):
        if self.i < len(self.drop_values):
            self.dropblock.drop_prob = float(self.drop_values[self.i])
        self.i += 1


# ---------------------------------------------------------------------------
# Pure-JAX reference (torch DropBlock2D semantics) for a correctness check.
# ---------------------------------------------------------------------------
def _dropblock_reference(x, noise, drop_prob, block_size):
    gamma = drop_prob / (block_size ** 2)
    seed = (noise < gamma).astype(jnp.float32)            # (B, H, W)
    pad = block_size // 2
    pooled = jax.lax.reduce_window(
        seed, -jnp.inf, jax.lax.max,
        window_dimensions=(1, block_size, block_size),
        window_strides=(1, 1, 1),
        padding=((0, 0), (pad, pad), (pad, pad)))
    if block_size % 2 == 0:
        pooled = pooled[:, :-1, :-1]
    block_mask = 1.0 - pooled
    numel = float(block_mask.size)
    scale = numel / jnp.maximum(jnp.sum(block_mask), 1.0)
    return x * block_mask[:, None, :, :] * scale


if __name__ == "__main__":
    key = jax.random.PRNGKey(0)
    kx, kn = jax.random.split(key)

    # small NCHW input consistent with a conv feature map
    x = jax.random.normal(kx, (2, 4, 16, 16), dtype=jnp.float32)

    sched = LinearScheduler(DropBlock2D(drop_prob=0.0, block_size=3),
                            start_value=0.0, stop_value=0.25, nr_steps=5)
    # advance the schedule a few steps so drop_prob > 0 and the kernels run
    for _ in range(3):
        sched.step()

    out = jax.block_until_ready(sched(x, kn))

    # reference uses the exact same noise (same key / shape / dtype)
    noise = jax.random.uniform(kn, (2, 16, 16), dtype=jnp.float32)
    ref = _dropblock_reference(x, noise, sched.dropblock.drop_prob,
                               sched.dropblock.block_size)

    assert out.shape == x.shape and out.dtype == x.dtype
    assert bool(jnp.all(jnp.isfinite(out)))
    assert bool(jnp.allclose(out, ref, atol=1e-5, rtol=1e-5))
    print("KERNEL_OK")
</pallas_src>

<mosaic_0001>
module attributes {stable_mosaic.version = 11 : i64} {
  func.func @kernel(%arg0: i32, %arg1: memref<1x16x16xf32, #tpu.memory_space<vmem>>, %arg2: memref<1x16x16xf32, #tpu.memory_space<vmem>>, %arg3: memref<1x16x18xf32, #tpu.memory_space<vmem>>, %arg4: memref<1x18x16xf32, #tpu.memory_space<vmem>>) attributes {dimension_semantics = [#tpu.dimension_semantics<parallel>], iteration_bounds = array<i64: 2>, scalar_prefetch = 0 : i64, scratch_operands = 2 : i64, tpu.core_type = #tpu.core_type<tc>, window_params = [{transform_indices = @transform_0, window_bounds = array<i64: 1, 16, 16>}, {transform_indices = @transform_1, window_bounds = array<i64: 1, 16, 16>}]} {
    %c0 = arith.constant 0 : index
    %c0_0 = arith.constant 0 : index
    %c0_1 = arith.constant 0 : index
    %0 = vector.load %arg1[%c0, %c0_0, %c0_1] : memref<1x16x16xf32, #tpu.memory_space<vmem>>, vector<1x16x16xf32>
    %cst = arith.constant 2.000000e+00 : f32
    %1 = vector.broadcast %cst : f32 to vector<1x16x18xf32>
    %c0_2 = arith.constant 0 : index
    %c0_3 = arith.constant 0 : index
    %c0_4 = arith.constant 0 : index
    %2 = vector.load %arg3[%c0_2, %c0_3, %c0_4] : memref<1x16x18xf32, #tpu.memory_space<vmem>>, vector<1x16x18xf32>
    tpu.vector_store %arg3[%c0_2, %c0_3, %c0_4], %1 {strides = array<i32>} : memref<1x16x18xf32, #tpu.memory_space<vmem>>, vector<1x16x18xf32>,
    %c0_5 = arith.constant 0 : index
    %c0_6 = arith.constant 0 : index
    %c1 = arith.constant 1 : index
    %3 = vector.load %arg3[%c0_5, %c0_6, %c1] : memref<1x16x18xf32, #tpu.memory_space<vmem>>, vector<1x16x16xf32>
    tpu.vector_store %arg3[%c0_5, %c0_6, %c1], %0 {strides = array<i32>} : memref<1x16x18xf32, #tpu.memory_space<vmem>>, vector<1x16x16xf32>,
    %c0_7 = arith.constant 0 : index
    %c0_8 = arith.constant 0 : index
    %c0_9 = arith.constant 0 : index
    %4 = vector.load %arg3[%c0_7, %c0_8, %c0_9] : memref<1x16x18xf32, #tpu.memory_space<vmem>>, vector<1x16x18xf32>
    %5 = vector.extract_strided_slice %4 {offsets = [0, 0, 0], sizes = [1, 16, 16], strides = [1, 1, 1]} : vector<1x16x18xf32> to vector<1x16x16xf32>
    %6 = vector.extract_strided_slice %4 {offsets = [0, 0, 1], sizes = [1, 16, 16], strides = [1, 1, 1]} : vector<1x16x18xf32> to vector<1x16x16xf32>
    %7 = arith.minimumf %5, %6 : vector<1x16x16xf32>
    %8 = vector.extract_strided_slice %4 {offsets = [0, 0, 2], sizes = [1, 16, 16], strides = [1, 1, 1]} : vector<1x16x18xf32> to vector<1x16x16xf32>
    %9 = arith.minimumf %7, %8 : vector<1x16x16xf32>
    %cst_10 = arith.constant 2.000000e+00 : f32
    %10 = vector.broadcast %cst_10 : f32 to vector<1x18x16xf32>
    %c0_11 = arith.constant 0 : index
    %c0_12 = arith.constant 0 : index
    %c0_13 = arith.constant 0 : index
    %11 = vector.load %arg4[%c0_11, %c0_12, %c0_13] : memref<1x18x16xf32, #tpu.memory_space<vmem>>, vector<1x18x16xf32>
    tpu.vector_store %arg4[%c0_11, %c0_12, %c0_13], %10 {strides = array<i32>} : memref<1x18x16xf32, #tpu.memory_space<vmem>>, vector<1x18x16xf32>,
    %c0_14 = arith.constant 0 : index
    %c1_15 = arith.constant 1 : index
    %c0_16 = arith.constant 0 : index
    %12 = vector.load %arg4[%c0_14, %c1_15, %c0_16] : memref<1x18x16xf32, #tpu.memory_space<vmem>>, vector<1x16x16xf32>
    tpu.vector_store %arg4[%c0_14, %c1_15, %c0_16], %9 {strides = array<i32>} : memref<1x18x16xf32, #tpu.memory_space<vmem>>, vector<1x16x16xf32>,
    %c0_17 = arith.constant 0 : index
    %c0_18 = arith.constant 0 : index
    %c0_19 = arith.constant 0 : index
    %13 = vector.load %arg4[%c0_17, %c0_18, %c0_19] : memref<1x18x16xf32, #tpu.memory_space<vmem>>, vector<1x18x16xf32>
    %14 = vector.extract_strided_slice %13 {offsets = [0, 0, 0], sizes = [1, 16, 16], strides = [1, 1, 1]} : vector<1x18x16xf32> to vector<1x16x16xf32>
    %15 = vector.extract_strided_slice %13 {offsets = [0, 1, 0], sizes = [1, 16, 16], strides = [1, 1, 1]} : vector<1x18x16xf32> to vector<1x16x16xf32>
    %16 = arith.minimumf %14, %15 : vector<1x16x16xf32>
    %17 = vector.extract_strided_slice %13 {offsets = [0, 2, 0], sizes = [1, 16, 16], strides = [1, 1, 1]} : vector<1x18x16xf32> to vector<1x16x16xf32>
    %18 = arith.minimumf %16, %17 : vector<1x16x16xf32>
    %cst_20 = arith.constant 0.013888889 : f32
    %19 = vector.broadcast %cst_20 : f32 to vector<1x16x16xf32>
    %20 = arith.cmpf oge, %18, %19 : vector<1x16x16xf32>
    %21 = arith.extui %20 : vector<1x16x16xi1> to vector<1x16x16xi32>
    %22 = arith.sitofp %21 : vector<1x16x16xi32> to vector<1x16x16xf32>
    %c0_21 = arith.constant 0 : index
    %c0_22 = arith.constant 0 : index
    %c0_23 = arith.constant 0 : index
    %23 = vector.load %arg2[%c0_21, %c0_22, %c0_23] : memref<1x16x16xf32, #tpu.memory_space<vmem>>, vector<1x16x16xf32>
    tpu.vector_store %arg2[%c0_21, %c0_22, %c0_23], %22 {strides = array<i32>} : memref<1x16x16xf32, #tpu.memory_space<vmem>>, vector<1x16x16xf32>,
    return
  }
  func.func @transform_0(%arg0: i32) -> (i32, i32, i32) {
    %c0_i32 = arith.constant 0 : i32
    %c0_i32_0 = arith.constant 0 : i32
    %c0_i32_1 = arith.constant 0 : i32
    return %arg0, %c0_i32, %c0_i32_0 : i32, i32, i32
  }
  func.func @transform_1(%arg0: i32) -> (i32, i32, i32) {
    %c0_i32 = arith.constant 0 : i32
    %c0_i32_0 = arith.constant 0 : i32
    %c0_i32_1 = arith.constant 0 : i32
    return %arg0, %c0_i32, %c0_i32_0 : i32, i32, i32
  }
}

</mosaic_0001>

<llo_original>
// kernel: tpu_custom_call.1
$region0: #{tpu_custom_call.1}
  #allocation0 [shape = 'u32[]', space=smem, size = 0x4, offset = 0x4, fixed_abs, tag = 'smem constant byte address 0x4 - core index']
  #allocation1 [shape = 'u32[144,128]{1,0:T(1,128)}', space=vmem, size = 0x12000, scoped, tag = 'internal scratch']
  #allocation2 [shape = 'f32[1,16,18]{2,1,0:T(8,128)}', space=vmem, size = 0x2000, scoped, tag = 'scratch operand']
  #allocation3 [shape = 'f32[1,18,16]{2,1,0:T(8,128)}', space=vmem, size = 0x3000, scoped, tag = 'scratch operand']
  %s0 = inlined_call_operand.hbm [shape: f32[2,16,16], index: 0, kind: input, shape index: {}]
  %s1 = inlined_call_operand.hbm [shape: f32[2,16,16], index: 1, kind: output, shape index: {}]
  %s2 = sld [smem:[#allocation0]]
  $region41: #{tpu_custom_call.1} parent=0
    _
  %s4 = ssub.s32 1, %s2
  %s5 = scalar_select 0, %s4, %s2
  $region1: #{tpu_custom_call.1} parent=0
    #allocation4 [shape = 'u8[16384]{0}', space=vmem, size = 0x4000, scoped, tag = 'input window, operand 0']
    #allocation5 [shape = 's32[2]{0}', space=sflag, size = 0x8, scoped, tag = 'scoped memory for tpu_custom_call.1']
    #allocation6 [shape = 's32[2]{0}', space=sflag, size = 0x8, scoped, tag = 'scoped memory for tpu_custom_call.1']
    #allocation7 [shape = 'u8[16384]{0}', space=vmem, size = 0x4000, scoped, tag = 'output window, operand 0']
    %6 = vsyncpa [#allocation5], 0
    %s7 = scalar_lea.sflag [#allocation5], 1
    %8 = vsyncpa %s7, 0
    %9 = vsyncpa [#allocation6], 0
    %s10 = scalar_lea.sflag [#allocation6], 1
    %11 = vsyncpa %s10, 0
    loop: start=0, step=1, limit=4
    $region2: #{tpu_custom_call.1} parent=1 // loop_pre_header
      _
    $region3: #{tpu_custom_call.1} parent=1 // loop_header
      %s13 = sphi 0, %s17
      %p14 = scmp.ge.s32.totalorder %s13, 4
      %s23 = sphi 0, %s25
      %s26 = sphi 0, %s23
      %s27 = sphi 0, %s26
      %s43 = sphi 0, %s27
      %s49 = sphi 0, %s51
      %s52 = sphi 0, %s49
      %s53 = sphi 0, %s52
      %s69 = sphi 0, %s53
    $region4: #{tpu_custom_call.1} parent=1 // loop_header_branch
      %16 = sbr.rel (%p14) target = $region8
    $region5: #{tpu_custom_call.1} parent=1 // loop_body
      %s18 = ssub.s32 %s13, 1
      %s19 = ssub.s32 %s13, 2
      %s20 = sadd.s32 %s13, 1
      %s21 = ssub.s32 %s13, %s20
      %p22 = scmp.eq.s32.totalorder %s21, 0
      %s24 = sadd.s32 %s23, 1
      %s25 = scalar_select %p22, %s23, %s24
      %p28 = pneg %p22
      %p29 = scmp.eq.s32.totalorder %s13, 1
      %p30 = por %p28, %p29
      %p31 = scmp.ne.s32.totalorder %s23, %s26
      %p32 = scmp.eq.s32.totalorder %s13, 0
      %p33 = por %p31, %p32
      %p34 = scmp.ne.s32.totalorder %s23, %s26
      %p35 = scmp.eq.s32.totalorder %s18, 1
      %p36 = por %p34, %p35
      %p37 = scmp.ne.s32.totalorder %s26, %s27
      %p38 = scmp.eq.s32.totalorder %s18, 0
      %p39 = por %p37, %p38
      %p40 = scmp.ne.s32.totalorder %s26, %s27
      %p41 = scmp.eq.s32.totalorder %s19, 1
      %p42 = por %p40, %p41
      %p44 = scmp.ne.s32.totalorder %s27, %s43
      %p45 = scmp.eq.s32.totalorder %s19, 0
      %p46 = por %p44, %p45
      %s47 = ssub.s32 %s13, %s20
      %p48 = scmp.eq.s32.totalorder %s47, 0
      %s50 = sadd.s32 %s49, 1
      %s51 = scalar_select %p48, %s49, %s50
      %p54 = pneg %p48
      %p55 = scmp.eq.s32.totalorder %s13, 1
      %p56 = por %p54, %p55
      %p57 = scmp.ne.s32.totalorder %s49, %s52
      %p58 = scmp.eq.s32.totalorder %s13, 0
      %p59 = por %p57, %p58
      %p60 = scmp.ne.s32.totalorder %s49, %s52
      %p61 = scmp.eq.s32.totalorder %s18, 1
      %p62 = por %p60, %p61
      %p63 = scmp.ne.s32.totalorder %s52, %s53
      %p64 = scmp.eq.s32.totalorder %s18, 0
      %p65 = por %p63, %p64
      %p66 = scmp.ne.s32.totalorder %s52, %s53
      %p67 = scmp.eq.s32.totalorder %s19, 1
      %p68 = por %p66, %p67
      %p70 = scmp.ne.s32.totalorder %s53, %s69
      %p71 = scmp.eq.s32.totalorder %s19, 0
      %p72 = por %p70, %p71
      %p73 = scmp.le.s32.totalorder 1, %s13
      %p74 = scmp.lt.s32.totalorder %s13, 3
      %p75 = pnand %p73, %p74
      %p76 = pneg %p75
      // Predicated region
      $region9: #{tpu_custom_call.1} parent=5 // pred_check
        _
      $region10: #{tpu_custom_call.1} parent=5 // pred_check_branch
        %78 = sbr.rel (%p75) target = $region12
      $region11: #{tpu_custom_call.1} parent=5 // pred_region
        %s79 = ssub.s32 %s13, 1
      $region12: #{tpu_custom_call.1} parent=5 // pred_fallthru
        _
      %p80 = scmp.lt.s32.totalorder %s13, 2
      // Predicated region
      $region13: #{tpu_custom_call.1} parent=5 // pred_check
        %p81 = pneg %p80
      $region14: #{tpu_custom_call.1} parent=5 // pred_check_branch
        %83 = sbr.rel (%p81) target = $region16
      $region15: #{tpu_custom_call.1} parent=5 // pred_region
        // Predicated region
        $region17: #{tpu_custom_call.1} parent=15 // pred_check
          %p84 = pneg %p33
        $region18: #{tpu_custom_call.1} parent=15 // pred_check_branch
          %86 = sbr.rel (%p84) target = $region20
        $region19: #{tpu_custom_call.1} parent=15 // pred_region
          %s87 = sand.u32 %s23, 1
          %s88 = scalar_lea.sflag [#allocation5], %s87
          %s89 = sand.u32 %s23, 1
          %s90 = smul.addr %s89, 16
          %s91 = scalar_lea.vmem [#allocation4], %s90
          %s93 = ssub.s32 256, 256
          %94 = vsyncadd %s88, %s93
          %s95 = smul.addr %s13, 2
          %s96 = smul.addr %s95, 128
          %s97 = scalar_lea.hbm %s0, %s96
          %s98 = sshll.u32 %s91, 4
          %s99 = int_to_ptr.vmem [resolvable:$true] %s98
          %104 = dma.hbm_to_vmem [thread:$0]  %s97, 256, %s99, %s88, 128, 128, 8
        $region20: #{tpu_custom_call.1} parent=15 // pred_fallthru
          _
      $region16: #{tpu_custom_call.1} parent=5 // pred_fallthru
        _
      %p105 = scmp.le.s32.totalorder 1, %s13
      %p106 = scmp.lt.s32.totalorder %s13, 3
      %p107 = pnand %p105, %p106
      %p108 = pneg %p107
      // Predicated region
      $region21: #{tpu_custom_call.1} parent=5 // pred_check
        _
      $region22: #{tpu_custom_call.1} parent=5 // pred_check_branch
        %110 = sbr.rel (%p107) target = $region24
      $region23: #{tpu_custom_call.1} parent=5 // pred_region
        %s111 = ssub.s32 %s13, 1
        %s112 = sand.u32 %s26, 1
        %s113 = scalar_lea.sflag [#allocation5], %s112
        %s114 = sand.u32 %s26, 1
        %s115 = smul.addr %s114, 16
        %s116 = scalar_lea.vmem [#allocation4], %s115
        // Predicated region
        $region25: #{tpu_custom_call.1} parent=23 // pred_check
          %p117 = pneg %p39
        $region26: #{tpu_custom_call.1} parent=23 // pred_check_branch
          %119 = sbr.rel (%p117) target = $region28
        $region27: #{tpu_custom_call.1} parent=23 // pred_region
          %120 = dma.done %s113, 256
        $region28: #{tpu_custom_call.1} parent=23 // pred_fallthru
          _
        %s121 = sand.u32 %s26, 1
        %s122 = scalar_lea.sflag [#allocation5], %s121
        %s123 = sand.u32 %s26, 1
        %s124 = smul.addr %s123, 16
        %s125 = scalar_lea.vmem [#allocation4], %s124
        %p126 = pneg %p39
        %p127 = pneg %p36
        %p128 = pneg %p65
        %p129 = pneg %p62
        %s130 = sand.u32 %s52, 1
        %s131 = scalar_lea.sflag [#allocation6], %s130
        %s132 = sand.u32 %s52, 1
        %s133 = smul.addr %s132, 16
        %s134 = scalar_lea.vmem [#allocation7], %s133
        %v135 = vld [vmem:[%s116] sm:$0xff]
        %v136 = vld [vmem:[%s116 + $0x8] sm:$0xff]
        %vm137 = vcmask 146432
        %138 = vst.msk [vmem:[#allocation2] sm:$0xff] %vm137, 2.0
        %139 = vst.msk [vmem:[#allocation2 + $0x8] sm:$0xff] %vm137, 2.0
        %142 = vrot.lane.b32.xlu0 %v135, 1
        %v143 = vpop.permute.xlu0 %142
        %144 = vrot.lane.b32.xlu0 %v136, 1
        %v145 = vpop.permute.xlu0 %144
        %vm148 = vcmask 138248
        %149 = vst.msk [vmem:[#allocation2] sm:$0xff] %vm148, %v143
        %150 = vst.msk [vmem:[#allocation2 + $0x8] sm:$0xff] %vm148, %v145
        %v151 = vld [vmem:[#allocation2] sm:$0xff]
        %v152 = vld [vmem:[#allocation2 + $0x8] sm:$0xff]
        %155 = vrot.lane.b32.xlu0 %v151, 127
        %v156 = vpop.permute.xlu0 %155
        %157 = vrot.lane.b32.xlu0 %v152, 127
        %v158 = vpop.permute.xlu0 %157
        %v161 = vmin.f32 %v151, %v156
        %v162 = vmin.f32 %v152, %v158
        %163 = vrot.lane.b32.xlu0 %v151, 126
        %v164 = vpop.permute.xlu0 %163
        %165 = vrot.lane.b32.xlu0 %v152, 126
        %v166 = vpop.permute.xlu0 %165
        %v169 = vmin.f32 %v161, %v164
        %v170 = vmin.f32 %v162, %v166
        %vm171 = vcmask 130048
        %172 = vst.msk [vmem:[#allocation3] sm:$0xff] %vm171, 2.0
        %173 = vst.msk [vmem:[#allocation3 + $0x8] sm:$0xff] %vm171, 2.0
        %vm174 = vcmask 123904
        %175 = vst.msk [vmem:[#allocation3 + $0x10] sm:$0x3] %vm174, 2.0
        %176 = vst.msk [vmem:[#allocation3 + $0x1] sm:$0xff] %vm171, %v169
        %177 = vst.msk [vmem:[#allocation3 + $0x9] sm:$0xff] %vm171, %v170
        %v178 = vld [vmem:[#allocation3] sm:$0xff]
        %v179 = vld [vmem:[#allocation3 + $0x8] sm:$0xff]
        %v180 = vld [vmem:[#allocation3 + $0x10] sm:$0x3]
        %vm184 = vcmask 1046528
        %v185 = vrot.slane %v178, 1
        %v186 = vrot.slane %v179, 1
        %v187 = vsel %vm184, %v185, %v186
        %v188 = vrot.slane %v180, 1
        %v189 = vsel %vm184, %v186, %v188
        %v192 = vmin.f32 %v178, %v187
        %v193 = vmin.f32 %v179, %v189
        %vm194 = vcmask 1045504
        %v195 = vrot.slane %v178, 2
        %v196 = vrot.slane %v179, 2
        %v197 = vsel %vm194, %v195, %v196
        %v198 = vrot.slane %v180, 2
        %v199 = vsel %vm194, %v196, %v198
        %v202 = vmin.f32 %v192, %v197
        %v203 = vmin.f32 %v193, %v199
        %vm204 = vcmp.ge.f32.partialorder %v202, 0.013888889
        %vm205 = vcmp.ge.f32.partialorder %v203, 0.013888889
        %v206 = vsel %vm204, 1, 0
        %v207 = vsel %vm205, 1, 0
        %v208 = vcvt.s32.f32 %v206
        %v209 = vcvt.s32.f32 %v207
        %210 = vst.msk [vmem:[%s134] sm:$0xff] %vm171, %v208
        %211 = vst.msk [vmem:[%s134 + $0x8] sm:$0xff] %vm171, %v209
        %s212 = sand.u32 %s52, 1
        %s213 = scalar_lea.sflag [#allocation6], %s212
        %s214 = sand.u32 %s52, 1
        %s215 = smul.addr %s214, 16
        %s216 = scalar_lea.vmem [#allocation7], %s215
        // Predicated region
        $region29: #{tpu_custom_call.1} parent=23 // pred_check
          %p217 = pneg %p62
        $region30: #{tpu_custom_call.1} parent=23 // pred_check_branch
          %219 = sbr.rel (%p217) target = $region32
        $region31: #{tpu_custom_call.1} parent=23 // pred_region
          %s221 = ssub.s32 256, 256
          %222 = vsyncadd %s213, %s221
          %s223 = smul.addr %s18, 2
          %s224 = smul.addr %s223, 128
          %s225 = scalar_lea.hbm %s1, %s224
          %s226 = sshll.u32 %s216, 4
          %s227 = int_to_ptr.vmem [resolvable:$true] %s226
          %232 = dma.vmem_to_hbm [thread:$0]  %s227, 256, %s225, %s213, 128, 128, 8
        $region32: #{tpu_custom_call.1} parent=23 // pred_fallthru
          _
      $region24: #{tpu_custom_call.1} parent=5 // pred_fallthru
        _
      %p233 = scmp.le.s32.totalorder 2, %s13
      // Predicated region
      $region33: #{tpu_custom_call.1} parent=5 // pred_check
        %p234 = pneg %p233
      $region34: #{tpu_custom_call.1} parent=5 // pred_check_branch
        %236 = sbr.rel (%p234) target = $region36
      $region35: #{tpu_custom_call.1} parent=5 // pred_region
        %s237 = ssub.s32 %s13, 2
        // Predicated region
        $region37: #{tpu_custom_call.1} parent=35 // pred_check
          %p238 = pneg %p68
        $region38: #{tpu_custom_call.1} parent=35 // pred_check_branch
          %240 = sbr.rel (%p238) target = $region40
        $region39: #{tpu_custom_call.1} parent=35 // pred_region
          %s241 = sand.u32 %s53, 1
          %s242 = scalar_lea.sflag [#allocation6], %s241
          %s243 = sand.u32 %s53, 1
          %s244 = smul.addr %s243, 16
          %s245 = scalar_lea.vmem [#allocation7], %s244
          %246 = dma.done %s242, 256
        $region40: #{tpu_custom_call.1} parent=35 // pred_fallthru
          _
      $region36: #{tpu_custom_call.1} parent=5 // pred_fallthru
        _
    $region6: #{tpu_custom_call.1} parent=1 // loop_footer
      %s17 = sadd.s32 1, %s13
    $region7: #{tpu_custom_call.1} parent=1 // loop_footer_branch
      %12 = sbr.rel target = $region3
    $region8: #{tpu_custom_call.1} parent=1 // loop_exit
      _
    %247 = vsyncpa [#allocation5], 1
    %s248 = scalar_lea.sflag [#allocation5], 1
    %249 = vsyncpa %s248, 1
    %250 = vsyncpa [#allocation6], 1
    %s251 = scalar_lea.sflag [#allocation6], 1
    %252 = vsyncpa %s251, 1

</llo_original>
